<compile_context>
chip_gen: v5e
topology: v5e:2x2
jax: 0.10.0
libtpu: 0.0.40
codegen_flags: <defaults>
</compile_context>

<pallas_src>
import functools

import jax
import jax.numpy as jnp
from jax.experimental import pallas as pl
from jax.experimental.pallas import tpu as pltpu

_LOG_SQRT_2PI = 0.9189385332046727  # 0.5 * log(2*pi)
_LOG2 = 0.6931471805599453


def _softplus(x):
    # numerically stable softplus: max(x, 0) + log1p(exp(-|x|))
    return jnp.maximum(x, 0.0) + jnp.log1p(jnp.exp(-jnp.abs(x)))


def _actor_kernel(state_ref, eps_ref,
                  w1_ref, b1_ref, w2_ref, b2_ref,
                  whead_ref, bhead_ref,
                  tanh_a_ref, logp_ref):
    x = state_ref[...]                                   # [tb, n_obs]

    # MLP trunk: Linear -> ReLU -> Linear -> ReLU
    h1 = jnp.dot(x, w1_ref[...], preferred_element_type=jnp.float32) + b1_ref[...]
    h1 = jnp.maximum(h1, 0.0)
    h2 = jnp.dot(h1, w2_ref[...], preferred_element_type=jnp.float32) + b2_ref[...]
    h2 = jnp.maximum(h2, 0.0)

    # Fused heads: one matmul produces [mu | log_std].
    heads = jnp.dot(h2, whead_ref[...], preferred_element_type=jnp.float32) + bhead_ref[...]
    n_action = heads.shape[-1] // 2
    mu = heads[:, :n_action]
    log_std = jnp.clip(heads[:, n_action:], -20.0, 2.0)
    std = jnp.exp(log_std)

    # rsample: action = mu + std * eps  (eps ~ N(0, 1), supplied from host)
    eps = eps_ref[...]
    action = mu + std * eps

    # Normal(mu, std).log_prob(action) with z == eps exactly, minus the
    # tanh-squash correction, reduced in a single cross-lane sum.
    per_dim = (-0.5 * eps * eps - log_std - _LOG_SQRT_2PI
               - 2.0 * (_LOG2 - action - _softplus(-2.0 * action)))
    logp_ref[...] = jnp.sum(per_dim, axis=-1, keepdims=True)   # [tb, 1]
    tanh_a_ref[...] = jnp.tanh(action)                         # [tb, n_action]


@functools.partial(jax.jit, static_argnames=("tile_b",))
def squashed_gaussian_actor(state, eps, params, *, tile_b=512):
    """Forward pass (deter=False, with_log_prob=True).

    Returns (tanh(action), log_prob[..., None]).
    """
    B, n_obs = state.shape
    hidden = params["w1"].shape[1]
    n_action = eps.shape[1]

    # Pack the two heads into one weight/bias so the kernel does one matmul.
    whead = jnp.concatenate([params["wmu"], params["wstd"]], axis=1)  # [H, 2A]
    bhead = jnp.concatenate([params["bmu"], params["bstd"]], axis=1)  # [1, 2A]

    # Batch tiling: single tile at small B; pad to a multiple of tile_b for
    # large B so the grid is exact.
    tb = B if B <= tile_b else tile_b
    grid_b = pl.cdiv(B, tb)
    B_pad = grid_b * tb
    if B_pad != B:
        pad = ((0, B_pad - B), (0, 0))
        state = jnp.pad(state, pad)
        eps = jnp.pad(eps, pad)

    batch_map = lambda i: (i, 0)
    fixed_map = lambda i: (0, 0)

    tanh_a, logp = pl.pallas_call(
        _actor_kernel,
        out_shape=(jax.ShapeDtypeStruct((B_pad, n_action), jnp.float32),
                   jax.ShapeDtypeStruct((B_pad, 1), jnp.float32)),
        grid=(grid_b,),
        in_specs=[
            pl.BlockSpec((tb, n_obs), batch_map),          # state
            pl.BlockSpec((tb, n_action), batch_map),       # eps
            pl.BlockSpec((n_obs, hidden), fixed_map),      # w1  (VMEM-resident)
            pl.BlockSpec((1, hidden), fixed_map),          # b1
            pl.BlockSpec((hidden, hidden), fixed_map),     # w2
            pl.BlockSpec((1, hidden), fixed_map),          # b2
            pl.BlockSpec((hidden, 2 * n_action), fixed_map),  # [wmu | wstd]
            pl.BlockSpec((1, 2 * n_action), fixed_map),       # [bmu | bstd]
        ],
        out_specs=(
            pl.BlockSpec((tb, n_action), batch_map),
            pl.BlockSpec((tb, 1), batch_map),
        ),
        compiler_params=pltpu.CompilerParams(
            dimension_semantics=("parallel",)),
    )(state, eps,
      params["w1"], params["b1"], params["w2"], params["b2"],
      whead, bhead)

    if B_pad != B:
        tanh_a = tanh_a[:B]
        logp = logp[:B]
    return tanh_a, logp


def init_params(key, n_obs, n_action, hidden):
    """Deterministic synthetic init; weights stored as [in, out]."""
    ks = jax.random.split(key, 8)

    def lin(kw, kb, fan_in, fan_out):
        bound = 1.0 / jnp.sqrt(fan_in)
        w = jax.random.uniform(kw, (fan_in, fan_out), jnp.float32, -bound, bound)
        b = jax.random.uniform(kb, (1, fan_out), jnp.float32, -bound, bound)
        return w, b

    w1, b1 = lin(ks[0], ks[1], n_obs, hidden)
    w2, b2 = lin(ks[2], ks[3], hidden, hidden)
    wmu, bmu = lin(ks[4], ks[5], hidden, n_action)
    wstd, bstd = lin(ks[6], ks[7], hidden, n_action)
    return dict(w1=w1, b1=b1, w2=w2, b2=b2,
                wmu=wmu, bmu=bmu, wstd=wstd, bstd=bstd)


if __name__ == "__main__":
    B, n_obs, n_action, hidden = 2, 16, 8, 32

    key = jax.random.PRNGKey(0)
    k_state, k_eps, k_params = jax.random.split(key, 3)

    state = jax.random.normal(k_state, (B, n_obs), jnp.float32)
    eps = jax.random.normal(k_eps, (B, n_action), jnp.float32)
    params = init_params(k_params, n_obs, n_action, hidden)

    tanh_action, log_prob = squashed_gaussian_actor(state, eps, params)
    jax.block_until_ready((tanh_action, log_prob))

    assert tanh_action.shape == (B, n_action)
    assert log_prob.shape == (B, 1)

    # Pure-JAX reference check of the same math.
    h = jnp.maximum(state @ params["w1"] + params["b1"], 0.0)
    h = jnp.maximum(h @ params["w2"] + params["b2"], 0.0)
    mu = h @ params["wmu"] + params["bmu"]
    log_std = jnp.clip(h @ params["wstd"] + params["bstd"], -20.0, 2.0)
    std = jnp.exp(log_std)
    action = mu + std * eps
    lp = jnp.sum(-0.5 * eps ** 2 - log_std - _LOG_SQRT_2PI, axis=-1)
    lp -= jnp.sum(2.0 * (_LOG2 - action - jax.nn.softplus(-2.0 * action)), axis=-1)
    assert jnp.allclose(tanh_action, jnp.tanh(action), atol=1e-5)
    assert jnp.allclose(log_prob[:, 0], lp, atol=1e-4)

    print("KERNEL_OK")
</pallas_src>

<mosaic_0001>
module attributes {stable_mosaic.version = 11 : i64} {
  func.func @_actor_kernel(%arg0: i32, %arg1: memref<2x16xf32, #tpu.memory_space<vmem>>, %arg2: memref<2x8xf32, #tpu.memory_space<vmem>>, %arg3: memref<16x32xf32, #tpu.memory_space<vmem>>, %arg4: memref<1x32xf32, #tpu.memory_space<vmem>>, %arg5: memref<32x32xf32, #tpu.memory_space<vmem>>, %arg6: memref<1x32xf32, #tpu.memory_space<vmem>>, %arg7: memref<32x16xf32, #tpu.memory_space<vmem>>, %arg8: memref<1x16xf32, #tpu.memory_space<vmem>>, %arg9: memref<2x8xf32, #tpu.memory_space<vmem>>, %arg10: memref<2x1xf32, #tpu.memory_space<vmem>>) attributes {dimension_semantics = [#tpu.dimension_semantics<parallel>], iteration_bounds = array<i64: 1>, scalar_prefetch = 0 : i64, scratch_operands = 0 : i64, tpu.core_type = #tpu.core_type<tc>, window_params = [{transform_indices = @transform_0, window_bounds = array<i64: 2, 16>}, {transform_indices = @transform_1, window_bounds = array<i64: 2, 8>}, {pipeline_mode = #tpu.pipeline_mode<synchronous>, transform_indices = @transform_2, window_bounds = array<i64: 16, 32>}, {pipeline_mode = #tpu.pipeline_mode<synchronous>, transform_indices = @transform_3, window_bounds = array<i64: 1, 32>}, {pipeline_mode = #tpu.pipeline_mode<synchronous>, transform_indices = @transform_4, window_bounds = array<i64: 32, 32>}, {pipeline_mode = #tpu.pipeline_mode<synchronous>, transform_indices = @transform_5, window_bounds = array<i64: 1, 32>}, {pipeline_mode = #tpu.pipeline_mode<synchronous>, transform_indices = @transform_6, window_bounds = array<i64: 32, 16>}, {pipeline_mode = #tpu.pipeline_mode<synchronous>, transform_indices = @transform_7, window_bounds = array<i64: 1, 16>}, {transform_indices = @transform_8, window_bounds = array<i64: 2, 8>}, {transform_indices = @transform_9, window_bounds = array<i64: 2, 1>}]} {
    %c0 = arith.constant 0 : index
    %c0_0 = arith.constant 0 : index
    %0 = vector.load %arg1[%c0, %c0_0] : memref<2x16xf32, #tpu.memory_space<vmem>>, vector<2x16xf32>
    %c0_1 = arith.constant 0 : index
    %c0_2 = arith.constant 0 : index
    %1 = vector.load %arg3[%c0_1, %c0_2] : memref<16x32xf32, #tpu.memory_space<vmem>>, vector<16x32xf32>
    %cst = arith.constant dense<0.000000e+00> : vector<2x32xf32>
    %2 = tpu.matmul %0, %1, %cst {dimension_numbers = #tpu.dot_dimension_numbers<[1], [0], [0], [1], [0, 0, 1, 1], [], []>} : vector<2x16xf32>, vector<16x32xf32>, vector<2x32xf32> -> vector<2x32xf32>
    %c0_3 = arith.constant 0 : index
    %c0_4 = arith.constant 0 : index
    %3 = vector.load %arg4[%c0_3, %c0_4] : memref<1x32xf32, #tpu.memory_space<vmem>>, vector<1x32xf32>
    %4 = vector.broadcast %3 : vector<1x32xf32> to vector<2x32xf32>
    %5 = arith.addf %2, %4 : vector<2x32xf32>
    %cst_5 = arith.constant 0.000000e+00 : f32
    %6 = vector.broadcast %cst_5 : f32 to vector<2x32xf32>
    %7 = arith.maximumf %5, %6 : vector<2x32xf32>
    %c0_6 = arith.constant 0 : index
    %c0_7 = arith.constant 0 : index
    %8 = vector.load %arg5[%c0_6, %c0_7] : memref<32x32xf32, #tpu.memory_space<vmem>>, vector<32x32xf32>
    %cst_8 = arith.constant dense<0.000000e+00> : vector<2x32xf32>
    %9 = tpu.matmul %7, %8, %cst_8 {dimension_numbers = #tpu.dot_dimension_numbers<[1], [0], [0], [1], [0, 0, 1, 1], [], []>} : vector<2x32xf32>, vector<32x32xf32>, vector<2x32xf32> -> vector<2x32xf32>
    %c0_9 = arith.constant 0 : index
    %c0_10 = arith.constant 0 : index
    %10 = vector.load %arg6[%c0_9, %c0_10] : memref<1x32xf32, #tpu.memory_space<vmem>>, vector<1x32xf32>
    %11 = vector.broadcast %10 : vector<1x32xf32> to vector<2x32xf32>
    %12 = arith.addf %9, %11 : vector<2x32xf32>
    %cst_11 = arith.constant 0.000000e+00 : f32
    %13 = vector.broadcast %cst_11 : f32 to vector<2x32xf32>
    %14 = arith.maximumf %12, %13 : vector<2x32xf32>
    %c0_12 = arith.constant 0 : index
    %c0_13 = arith.constant 0 : index
    %15 = vector.load %arg7[%c0_12, %c0_13] : memref<32x16xf32, #tpu.memory_space<vmem>>, vector<32x16xf32>
    %cst_14 = arith.constant dense<0.000000e+00> : vector<2x16xf32>
    %16 = tpu.matmul %14, %15, %cst_14 {dimension_numbers = #tpu.dot_dimension_numbers<[1], [0], [0], [1], [0, 0, 1, 1], [], []>} : vector<2x32xf32>, vector<32x16xf32>, vector<2x16xf32> -> vector<2x16xf32>
    %c0_15 = arith.constant 0 : index
    %c0_16 = arith.constant 0 : index
    %17 = vector.load %arg8[%c0_15, %c0_16] : memref<1x16xf32, #tpu.memory_space<vmem>>, vector<1x16xf32>
    %18 = vector.broadcast %17 : vector<1x16xf32> to vector<2x16xf32>
    %19 = arith.addf %16, %18 : vector<2x16xf32>
    %20 = vector.extract_strided_slice %19 {offsets = [0, 0], sizes = [2, 8], strides = [1, 1]} : vector<2x16xf32> to vector<2x8xf32>
    %21 = vector.extract_strided_slice %19 {offsets = [0, 8], sizes = [2, 8], strides = [1, 1]} : vector<2x16xf32> to vector<2x8xf32>
    %cst_17 = arith.constant -2.000000e+01 : f32
    %cst_18 = arith.constant 2.000000e+00 : f32
    %22 = vector.broadcast %cst_17 : f32 to vector<2x8xf32>
    %23 = arith.maximumf %22, %21 : vector<2x8xf32>
    %24 = vector.broadcast %cst_18 : f32 to vector<2x8xf32>
    %25 = arith.minimumf %24, %23 : vector<2x8xf32>
    %26 = math.exp %25 : vector<2x8xf32>
    %c0_19 = arith.constant 0 : index
    %c0_20 = arith.constant 0 : index
    %27 = vector.load %arg2[%c0_19, %c0_20] : memref<2x8xf32, #tpu.memory_space<vmem>>, vector<2x8xf32>
    %28 = arith.mulf %26, %27 : vector<2x8xf32>
    %29 = arith.addf %20, %28 : vector<2x8xf32>
    %cst_21 = arith.constant -5.000000e-01 : f32
    %30 = vector.broadcast %cst_21 : f32 to vector<2x8xf32>
    %31 = arith.mulf %30, %27 : vector<2x8xf32>
    %32 = arith.mulf %31, %27 : vector<2x8xf32>
    %33 = arith.subf %32, %25 : vector<2x8xf32>
    %cst_22 = arith.constant 0.918938517 : f32
    %34 = vector.broadcast %cst_22 : f32 to vector<2x8xf32>
    %35 = arith.subf %33, %34 : vector<2x8xf32>
    %cst_23 = arith.constant 0.693147182 : f32
    %36 = vector.broadcast %cst_23 : f32 to vector<2x8xf32>
    %37 = arith.subf %36, %29 : vector<2x8xf32>
    %cst_24 = arith.constant -2.000000e+00 : f32
    %38 = vector.broadcast %cst_24 : f32 to vector<2x8xf32>
    %39 = arith.mulf %38, %29 : vector<2x8xf32>
    %cst_25 = arith.constant 0.000000e+00 : f32
    %40 = vector.broadcast %cst_25 : f32 to vector<2x8xf32>
    %41 = arith.maximumf %39, %40 : vector<2x8xf32>
    %42 = math.absf %39 : vector<2x8xf32>
    %cst_26 = arith.constant 0.000000e+00 : f32
    %43 = vector.broadcast %cst_26 : f32 to vector<2x8xf32>
    %44 = arith.subf %43, %42 : vector<2x8xf32>
    %45 = math.exp %44 : vector<2x8xf32>
    %46 = math.log1p %45 : vector<2x8xf32>
    %47 = arith.addf %41, %46 : vector<2x8xf32>
    %48 = arith.subf %37, %47 : vector<2x8xf32>
    %cst_27 = arith.constant 2.000000e+00 : f32
    %49 = vector.broadcast %cst_27 : f32 to vector<2x8xf32>
    %50 = arith.mulf %49, %48 : vector<2x8xf32>
    %51 = arith.subf %35, %50 : vector<2x8xf32>
    %cst_28 = arith.constant dense<0.000000e+00> : vector<2xf32>
    %52 = vector.multi_reduction <add>, %51, %cst_28 [1] : vector<2x8xf32> to vector<2xf32>
    %53 = vector.shape_cast %52 : vector<2xf32> to vector<2x1xf32>
    %c0_29 = arith.constant 0 : index
    %c0_30 = arith.constant 0 : index
    %54 = vector.load %arg10[%c0_29, %c0_30] : memref<2x1xf32, #tpu.memory_space<vmem>>, vector<2x1xf32>
    tpu.vector_store %arg10[%c0_29, %c0_30], %53 {strides = array<i32>} : memref<2x1xf32, #tpu.memory_space<vmem>>, vector<2x1xf32>,
    %55 = math.tanh %29 : vector<2x8xf32>
    %c0_31 = arith.constant 0 : index
    %c0_32 = arith.constant 0 : index
    %56 = vector.load %arg9[%c0_31, %c0_32] : memref<2x8xf32, #tpu.memory_space<vmem>>, vector<2x8xf32>
    tpu.vector_store %arg9[%c0_31, %c0_32], %55 {strides = array<i32>} : memref<2x8xf32, #tpu.memory_space<vmem>>, vector<2x8xf32>,
    return
  }
  func.func @transform_0(%arg0: i32) -> (i32, i32) {
    %c0_i32 = arith.constant 0 : i32
    %c0_i32_0 = arith.constant 0 : i32
    return %arg0, %c0_i32 : i32, i32
  }
  func.func @transform_1(%arg0: i32) -> (i32, i32) {
    %c0_i32 = arith.constant 0 : i32
    %c0_i32_0 = arith.constant 0 : i32
    return %arg0, %c0_i32 : i32, i32
  }
  func.func @transform_2(%arg0: i32) -> (i32, i32) {
    %c0_i32 = arith.constant 0 : i32
    %c0_i32_0 = arith.constant 0 : i32
    %c0_i32_1 = arith.constant 0 : i32
    return %c0_i32, %c0_i32_0 : i32, i32
  }
  func.func @transform_3(%arg0: i32) -> (i32, i32) {
    %c0_i32 = arith.constant 0 : i32
    %c0_i32_0 = arith.constant 0 : i32
    %c0_i32_1 = arith.constant 0 : i32
    return %c0_i32, %c0_i32_0 : i32, i32
  }
  func.func @transform_4(%arg0: i32) -> (i32, i32) {
    %c0_i32 = arith.constant 0 : i32
    %c0_i32_0 = arith.constant 0 : i32
    %c0_i32_1 = arith.constant 0 : i32
    return %c0_i32, %c0_i32_0 : i32, i32
  }
  func.func @transform_5(%arg0: i32) -> (i32, i32) {
    %c0_i32 = arith.constant 0 : i32
    %c0_i32_0 = arith.constant 0 : i32
    %c0_i32_1 = arith.constant 0 : i32
    return %c0_i32, %c0_i32_0 : i32, i32
  }
  func.func @transform_6(%arg0: i32) -> (i32, i32) {
    %c0_i32 = arith.constant 0 : i32
    %c0_i32_0 = arith.constant 0 : i32
    %c0_i32_1 = arith.constant 0 : i32
    return %c0_i32, %c0_i32_0 : i32, i32
  }
  func.func @transform_7(%arg0: i32) -> (i32, i32) {
    %c0_i32 = arith.constant 0 : i32
    %c0_i32_0 = arith.constant 0 : i32
    %c0_i32_1 = arith.constant 0 : i32
    return %c0_i32, %c0_i32_0 : i32, i32
  }
  func.func @transform_8(%arg0: i32) -> (i32, i32) {
    %c0_i32 = arith.constant 0 : i32
    %c0_i32_0 = arith.constant 0 : i32
    return %arg0, %c0_i32 : i32, i32
  }
  func.func @transform_9(%arg0: i32) -> (i32, i32) {
    %c0_i32 = arith.constant 0 : i32
    %c0_i32_0 = arith.constant 0 : i32
    return %arg0, %c0_i32 : i32, i32
  }
}

</mosaic_0001>

<llo_original>
// kernel: squashed_gaussian_actor.1
$region0: #{squashed_gaussian_actor.1}
  #allocation0 [shape = 'u32[]', space=smem, size = 0x4, offset = 0x4, fixed_abs, tag = 'smem constant byte address 0x4 - core index']
  #allocation1 [shape = 'u32[72,128]{1,0:T(1,128)}', space=vmem, size = 0x9000, scoped, tag = 'internal scratch']
  %s0 = inlined_call_operand.vmem [shape: f32[2,16], index: 0, kind: input, shape index: {}]
  %s1 = inlined_call_operand.vmem [shape: f32[2,8], index: 1, kind: input, shape index: {}]
  %s2 = inlined_call_operand.vmem [shape: f32[16,32], index: 2, kind: input, shape index: {}]
  %s3 = inlined_call_operand.vmem [shape: f32[1,32], index: 3, kind: input, shape index: {}]
  %s4 = inlined_call_operand.vmem [shape: f32[32,32], index: 4, kind: input, shape index: {}]
  %s5 = inlined_call_operand.vmem [shape: f32[1,32], index: 5, kind: input, shape index: {}]
  %s6 = inlined_call_operand.vmem [shape: f32[32,16], index: 6, kind: input, shape index: {}]
  %s7 = inlined_call_operand.vmem [shape: f32[1,16], index: 7, kind: input, shape index: {}]
  %s8 = inlined_call_operand.hbm [shape: f32[2,8], index: 8, kind: output, shape index: {0}]
  %s9 = inlined_call_operand.vmem [shape: f32[2,1], index: 9, kind: output, shape index: {1}]
  %10 = xla_tuple %s8, %s9
  %s11 = sld [smem:[#allocation0]]
  $region50: #{squashed_gaussian_actor.1} parent=0
    _
  %s13 = ssub.s32 1, %s11
  %s14 = scalar_select 0, %s13, %s11
  $region1: #{squashed_gaussian_actor.1} parent=0
    #allocation2 [shape = 'u8[1024]{0}', space=vmem, size = 0x400, scoped, tag = 'output window, operand 0, single buffered']
    #allocation3 [shape = 's32[1]{0}', space=sflag, size = 0x4, scoped, tag = 'scoped memory for squashed_gaussian_actor.1']
    %15 = vsyncpa [#allocation3], 0
    // Predicated region
    $region2: #{squashed_gaussian_actor.1} parent=1 // pred_check
      _
    $region3: #{squashed_gaussian_actor.1} parent=1 // pred_check_branch
      %17 = sbr.rel (0) target = $region5
    $region4: #{squashed_gaussian_actor.1} parent=1 // pred_region
      _
    $region5: #{squashed_gaussian_actor.1} parent=1 // pred_fallthru
      _
    // Predicated region
    $region6: #{squashed_gaussian_actor.1} parent=1 // pred_check
      _
    $region7: #{squashed_gaussian_actor.1} parent=1 // pred_check_branch
      %19 = sbr.rel (0) target = $region9
    $region8: #{squashed_gaussian_actor.1} parent=1 // pred_region
      _
    $region9: #{squashed_gaussian_actor.1} parent=1 // pred_fallthru
      _
    // Predicated region
    $region10: #{squashed_gaussian_actor.1} parent=1 // pred_check
      _
    $region11: #{squashed_gaussian_actor.1} parent=1 // pred_check_branch
      %21 = sbr.rel (0) target = $region13
    $region12: #{squashed_gaussian_actor.1} parent=1 // pred_region
      _
    $region13: #{squashed_gaussian_actor.1} parent=1 // pred_fallthru
      _
    // Predicated region
    $region14: #{squashed_gaussian_actor.1} parent=1 // pred_check
      _
    $region15: #{squashed_gaussian_actor.1} parent=1 // pred_check_branch
      %23 = sbr.rel (0) target = $region17
    $region16: #{squashed_gaussian_actor.1} parent=1 // pred_region
      _
    $region17: #{squashed_gaussian_actor.1} parent=1 // pred_fallthru
      _
    // Predicated region
    $region18: #{squashed_gaussian_actor.1} parent=1 // pred_check
      _
    $region19: #{squashed_gaussian_actor.1} parent=1 // pred_check_branch
      %25 = sbr.rel (0) target = $region21
    $region20: #{squashed_gaussian_actor.1} parent=1 // pred_region
      _
    $region21: #{squashed_gaussian_actor.1} parent=1 // pred_fallthru
      _
    // Predicated region
    $region22: #{squashed_gaussian_actor.1} parent=1 // pred_check
      _
    $region23: #{squashed_gaussian_actor.1} parent=1 // pred_check_branch
      %27 = sbr.rel (0) target = $region25
    $region24: #{squashed_gaussian_actor.1} parent=1 // pred_region
      _
    $region25: #{squashed_gaussian_actor.1} parent=1 // pred_fallthru
      _
    // Predicated region
    $region26: #{squashed_gaussian_actor.1} parent=1 // pred_check
      _
    $region27: #{squashed_gaussian_actor.1} parent=1 // pred_check_branch
      %29 = sbr.rel (0) target = $region29
    $region28: #{squashed_gaussian_actor.1} parent=1 // pred_region
      _
    $region29: #{squashed_gaussian_actor.1} parent=1 // pred_fallthru
      _
    // Predicated region
    $region30: #{squashed_gaussian_actor.1} parent=1 // pred_check
      _
    $region31: #{squashed_gaussian_actor.1} parent=1 // pred_check_branch
      %31 = sbr.rel (0) target = $region33
    $region32: #{squashed_gaussian_actor.1} parent=1 // pred_region
      _
    $region33: #{squashed_gaussian_actor.1} parent=1 // pred_fallthru
      _
    %v32 = vld [vmem:[%s0] sm:$0x3]
    %v33 = vld [vmem:[%s2] sm:$0xff]
    %v34 = vld [vmem:[%s2 + $0x8] sm:$0xff]
    %v35 = vld [vmem:[%s3] sm:$0x1]
    %v37 = vperm.slane %v35, 0
    %vm39 = vcmask 130048
    %v41 = vsel %vm39, %v32, 0
    %43 = vmatpush.msra.mxu0 0.0
    %44 = vmatpush.msra.mxu0 0.0
    %45 = vmatpush.msra.mxu0 0.0
    %46 = vmatpush.msra.mxu0 0.0
    %47 = vmatpush.msra.mxu0 0.0
    %48 = vmatpush.msra.mxu0 0.0
    %49 = vmatpush.msra.mxu0 0.0
    %50 = vmatpush.msra.mxu0 0.0
    %51 = vmatpush.msra.mxu0 0.0
    %52 = vmatpush.msra.mxu0 0.0
    %53 = vmatpush.msra.mxu0 0.0
    %54 = vmatpush.msra.mxu0 0.0
    %55 = vmatpush.msra.mxu0 0.0
    %56 = vmatpush.msra.mxu0 0.0
    %57 = vmatpush.msra.mxu0 %v34
    %58 = vmatpush.msra.mxu0 %v33
    %59 = vmatmul.f32.gmra.mxu0 %v41
    %v60 = vpop.f32.mrf.mxu0
    %v61 = vadd.f32 %v37, %v60
    %62 = vdwg.mxu0
    %v63 = vmax.f32 %v61, 0.0
    %v64 = vld [vmem:[%s4] sm:$0xff]
    %v65 = vld [vmem:[%s4 + $0x8] sm:$0xff]
    %v66 = vld [vmem:[%s4 + $0x10] sm:$0xff]
    %v67 = vld [vmem:[%s4 + $0x18] sm:$0xff]
    %v68 = vld [vmem:[%s5] sm:$0x1]
    %v70 = vperm.slane %v68, 0
    %vm72 = vcmask 261120
    %v74 = vsel %vm72, %v63, 0
    %76 = vmatpush.msra.mxu0 0.0
    %77 = vmatpush.msra.mxu0 0.0
    %78 = vmatpush.msra.mxu0 0.0
    %79 = vmatpush.msra.mxu0 0.0
    %80 = vmatpush.msra.mxu0 0.0
    %81 = vmatpush.msra.mxu0 0.0
    %82 = vmatpush.msra.mxu0 0.0
    %83 = vmatpush.msra.mxu0 0.0
    %84 = vmatpush.msra.mxu0 0.0
    %85 = vmatpush.msra.mxu0 0.0
    %86 = vmatpush.msra.mxu0 0.0
    %87 = vmatpush.msra.mxu0 0.0
    %88 = vmatpush.msra.mxu0 %v67
    %89 = vmatpush.msra.mxu0 %v66
    %90 = vmatpush.msra.mxu0 %v65
    %91 = vmatpush.msra.mxu0 %v64
    %92 = vmatmul.f32.gmra.mxu0 %v74
    %v93 = vpop.f32.mrf.mxu0
    %v94 = vadd.f32 %v70, %v93
    %95 = vdwg.mxu0
    %v96 = vmax.f32 %v94, 0.0
    %v97 = vld [vmem:[%s6] sm:$0xff]
    %v98 = vld [vmem:[%s6 + $0x8] sm:$0xff]
    %v99 = vld [vmem:[%s6 + $0x10] sm:$0xff]
    %v100 = vld [vmem:[%s6 + $0x18] sm:$0xff]
    %v101 = vld [vmem:[%s7] sm:$0x1]
    %v103 = vperm.slane %v101, 0
    %v106 = vsel %vm72, %v96, 0
    %108 = vmatpush.msra.mxu0 0.0
    %109 = vmatpush.msra.mxu0 0.0
    %110 = vmatpush.msra.mxu0 0.0
    %111 = vmatpush.msra.mxu0 0.0
    %112 = vmatpush.msra.mxu0 0.0
    %113 = vmatpush.msra.mxu0 0.0
    %114 = vmatpush.msra.mxu0 0.0
    %115 = vmatpush.msra.mxu0 0.0
    %116 = vmatpush.msra.mxu0 0.0
    %117 = vmatpush.msra.mxu0 0.0
    %118 = vmatpush.msra.mxu0 0.0
    %119 = vmatpush.msra.mxu0 0.0
    %120 = vmatpush.msra.mxu0 %v100
    %121 = vmatpush.msra.mxu0 %v99
    %122 = vmatpush.msra.mxu0 %v98
    %123 = vmatpush.msra.mxu0 %v97
    %124 = vmatmul.f32.gmra.mxu0 %v106
    %v125 = vpop.f32.mrf.mxu0
    %v126 = vadd.f32 %v103, %v125
    %127 = vdwg.mxu0
    %v128 = vmax.f32 %v126, -20.0
    %v129 = vmin.f32 %v128, 2.0
    %v130 = vmul.f32 %v129, 1.442695
    %v131 = vpow.pop %v130
    %v132 = vld [vmem:[%s1] sm:$0x3]
    %134 = vrot.lane.b32.xlu0 %v132, 8
    %v135 = vpop.permute.xlu0 %134
    %v137 = vmul.f32 %v131, %v135
    %139 = vrot.lane.b32.xlu0 %v137, 120
    %v140 = vpop.permute.xlu0 %139
    %v142 = vadd.f32 %v126, %v140
    %v143 = vmul.f32 %v132, -0.5
    %v144 = vmul.f32 %v143, %v132
    %146 = vrot.lane.b32.xlu0 %v129, 120
    %v147 = vpop.permute.xlu0 %146
    %v149 = vsub.f32 %v144, %v147
    %v150 = vsub.f32 %v149, 0.9189385
    %v151 = vsub.f32 0.6931472, %v142
    %v152 = vmul.f32 %v142, -2.0
    %v153 = vmax.f32 %v152, 0.0
    %v154 = vand.u32 2147483647, %v152
    %v155 = vsub.f32 0.0, %v154
    %v156 = vmul.f32 %v155, 1.442695
    %v157 = vpow.pop %v156
    %v158 = vadd.f32 %v157, 1.0
    %v159 = vlog2.pop %v158
    %v160 = vmul.f32 %v159, 0.6931472
    %v161 = vmul.f32 -0.5, %v157
    %v162 = vadd.f32 %v161, 1.0
    %v163 = vmul.f32 %v162, %v157
    %v164 = vand.u32 2147483647, %v157
    %vm165 = vcmp.lt.f32.partialorder %v164, 0.0004427343
    %v166 = vsel %vm165, %v163, %v160
    %v167 = vadd.f32 %v153, %v166
    %v168 = vsub.f32 %v151, %v167
    %v169 = vmul.f32 %v168, 2.0
    %v170 = vsub.f32 %v150, %v169
    %vm171 = vcmask 58368
    %v172 = vsel %vm171, %v170, 0.0
    %173 = vadd.xlane.f32.xlu0 %v172
    %v174 = vpop.xlane.xlu0 %173
    %vm175 = vcmask 1024
    %176 = vst.msk [vmem:[%s9] sm:$0x3] %vm175, %v174
    %v177 = vtanh.pop %v142
    %178 = vst.msk [vmem:[#allocation2] sm:$0x3] %vm171, %v177
    // Predicated region
    $region34: #{squashed_gaussian_actor.1} parent=1 // pred_check
      _
    $region35: #{squashed_gaussian_actor.1} parent=1 // pred_check_branch
      %180 = sbr.rel (0) target = $region37
    $region36: #{squashed_gaussian_actor.1} parent=1 // pred_region
      %182 = vsyncadd [#allocation3], 0
      %s184 = sshll.u32 [#allocation2], 4
      %s185 = int_to_ptr.vmem [resolvable:$true] %s184
      %s186 = sshll.u32 %s8, 4
      %s187 = int_to_ptr.hbm [resolvable:$true] %s186
      %189 = dma.vmem_to_hbm [thread:$0]  %s185, 32, %s187, [#allocation3]
    $region37: #{squashed_gaussian_actor.1} parent=1 // pred_fallthru
      _
    // Predicated region
    $region38: #{squashed_gaussian_actor.1} parent=1 // pred_check
      _
    $region39: #{squashed_gaussian_actor.1} parent=1 // pred_check_branch
      %191 = sbr.rel (0) target = $region41
    $region40: #{squashed_gaussian_actor.1} parent=1 // pred_region
      _
    $region41: #{squashed_gaussian_actor.1} parent=1 // pred_fallthru
      _
    // Predicated region
    $region42: #{squashed_gaussian_actor.1} parent=1 // pred_check
      _
    $region43: #{squashed_gaussian_actor.1} parent=1 // pred_check_branch
      %193 = sbr.rel (0) target = $region45
    $region44: #{squashed_gaussian_actor.1} parent=1 // pred_region
      %195 = dma.done [#allocation3], 32
    $region45: #{squashed_gaussian_actor.1} parent=1 // pred_fallthru
      _
    // Predicated region
    $region46: #{squashed_gaussian_actor.1} parent=1 // pred_check
      _
    $region47: #{squashed_gaussian_actor.1} parent=1 // pred_check_branch
      %197 = sbr.rel (0) target = $region49
    $region48: #{squashed_gaussian_actor.1} parent=1 // pred_region
      _
    $region49: #{squashed_gaussian_actor.1} parent=1 // pred_fallthru
      _
    %198 = vsyncpa [#allocation3], 1

</llo_original>
